<compile_context>
chip_gen: v6e
topology: v6e:2x2x1
jax: 0.10.0
libtpu: 0.0.40
codegen_flags: <defaults>
</compile_context>

<pallas_src>
import math
import functools

import jax
import jax.numpy as jnp
from jax.experimental import pallas as pl
from jax.experimental.pallas import tpu as pltpu


_INV_SQRT2 = 1.0 / math.sqrt(2.0)
_SQRT_2_OVER_PI = math.sqrt(2.0 / math.pi)


def _round_up(x, m):
    return ((x + m - 1) // m) * m


def _gelu_erf(x):
    # Exact GELU (PyTorch nn.GELU() default).
    return 0.5 * x * (1.0 + jax.lax.erf(x * _INV_SQRT2))


def _gelu_tanh(x):
    # tanh-approx GELU.  The transcendental is evaluated in f32 on the EUP (a
    # separate VLIW slot); the surrounding VALU math stays in x.dtype (bf16 on
    # v6e/v7x halves vreg/VALU pressure).
    inner = _SQRT_2_OVER_PI * (x + 0.044715 * (x * x * x))
    t = jnp.tanh(inner.astype(jnp.float32)).astype(x.dtype)
    return 0.5 * x * (1.0 + t)


def _vmem_budget_bytes():
    """~3/4 of per-core VMEM (128 MiB on v5e/v6e, 64 MiB on v7x); 64 MiB fallback."""
    cap = 64 * 1024 * 1024
    try:
        info = pltpu.get_tpu_info()
        cap = int(getattr(info, "vmem_capacity_bytes", cap)) or cap
    except Exception:
        pass
    return (cap * 3) // 4


def _ffn_working_set_bytes(tm, th, d, x_it, w_it):
    """Conservative per-step VMEM estimate (everything double-buffered)."""
    w = 2 * (d * th + th * d) * w_it          # W1 + W2 tiles
    xo = 2 * (tm * d) * x_it * 2              # x tile + out tile
    acc = tm * d * 4                          # f32 accumulator scratch
    bias = 2 * (th + d) * max(w_it, 4)        # b1 / b2 tiles (tiny)
    return w + xo + acc + bias


def _select_tiles(M, D_pad, H, x_it, w_it, tm_req, th_req, budget, sub):
    """Returns (tm_eff, th_eff, H_pad)."""
    H_full = _round_up(H, 128)

    # Row tile: MXU-aligned for large M, sublane-aligned shrink for small M.
    tm = min(_round_up(M, sub), _round_up(max(tm_req, sub), sub))
    # Variant guaranteeing >= 2 row tiles (keeps both v7x TensorCores busy).
    tm_split = max(sub, _round_up(-(-M // 2), sub)) if M > sub else tm

    # (a) W1/W2 fully VMEM-resident: single hidden tile, constant block index
    #     over the whole grid -> weights are DMA'd from HBM exactly once.
    if _ffn_working_set_bytes(min(tm, tm_split), H_full, D_pad, x_it, w_it) <= budget:
        return min(tm, tm_split), H_full, H_full

    # (b) Stream the hidden dimension in th-sized tiles.  Do not force a row
    #     split here: each extra row tile re-streams the full weights.
    th = max(128, min(H_full, (max(th_req, 128) // 128) * 128))
    while th > 128 and _ffn_working_set_bytes(tm, th, D_pad, x_it, w_it) > budget:
        th = max(128, ((th // 2) // 128) * 128)
    while tm > sub and _ffn_working_set_bytes(tm, th, D_pad, x_it, w_it) > budget:
        tm = max(sub, _round_up(tm // 2, sub))
    return tm, th, _round_up(H, th)


def _rezero_ffn_kernel(x_ref, w1_ref, b1_ref, w2_ref, b2_ref, g_ref,
                       o_ref, *acc_scratch, approx_gelu):
    # Grid: (row tiles, hidden tiles).  The hidden axis is the reduction for
    # the second matmul.  When the weights are VMEM-resident there is a single
    # hidden tile and no accumulator scratch is allocated.

    # First matmul for this hidden tile: (tm, D) @ (D, th), native-dtype MXU
    # operands (bf16 stays bf16), f32 accumulation.
    h = jnp.dot(x_ref[...], w1_ref[...], preferred_element_type=jnp.float32)

    if approx_gelu:
        # Fast path: tanh-approx GELU with VALU math in the weight dtype.
        cd = w2_ref.dtype
        hc = h.astype(cd) + b1_ref[...].astype(cd)
        hc = _gelu_tanh(hc)
    else:
        # Exact erf GELU in f32 (matches PyTorch nn.GELU() default).
        hc = _gelu_erf(h + b1_ref[...].astype(jnp.float32)).astype(w2_ref.dtype)

    # Second matmul partial sum: (tm, th) @ (th, D) -> f32.
    partial = jnp.dot(hc, w2_ref[...], preferred_element_type=jnp.float32)

    def _finalize(acc):
        out = acc + b2_ref[...].astype(jnp.float32)
        o_ref[...] = (out * g_ref[0]).astype(o_ref.dtype)   # ReZero scale

    if not acc_scratch:
        # Weights resident: single hidden tile -> write the output directly.
        _finalize(partial)
    else:
        acc_ref = acc_scratch[0]
        j = pl.program_id(1)

        @pl.when(j == 0)
        def _():
            acc_ref[...] = partial          # direct store, no zero-init + RMW

        @pl.when(j > 0)
        def _():
            acc_ref[...] += partial

        @pl.when(j == pl.num_programs(1) - 1)
        def _():
            _finalize(acc_ref[...])


@functools.partial(jax.jit, static_argnames=("tm", "th", "approx_gelu"))
def rezero_feed_forward(x, w1, b1, w2, b2, g, *, tm=512, th=512,
                        approx_gelu=False):
    """ReZero(FeedForward)(x) = (GELU(x@W1+b1)@W2+b2) * g.

    x: (B, S, D); w1: (D, H); b1: (H,); w2: (H, D); b2: (D,); g: scalar.
    """
    B, S, D = x.shape
    H = w1.shape[1]
    M = B * S

    x_it = jnp.dtype(x.dtype).itemsize
    w_it = jnp.dtype(w1.dtype).itemsize
    sub = {4: 8, 2: 16, 1: 32}.get(x_it, 8)     # dtype-native sublane size

    D_pad = _round_up(D, 128)                   # lane-dense loads/stores
    budget = _vmem_budget_bytes()
    tm_eff, th_eff, H_pad = _select_tiles(M, D_pad, H, x_it, w_it, tm, th,
                                          budget, sub)
    M_pad = _round_up(M, tm_eff)
    resident = (H_pad // th_eff) == 1

    x2d = x.reshape(M, D)
    if M_pad != M or D_pad != D:
        x2d = jnp.pad(x2d, ((0, M_pad - M), (0, D_pad - D)))
    if H_pad != H or D_pad != D:
        # Zero padding preserves the exact result: padded x columns are zero,
        # padded hidden units contribute GELU(0) * zero W2 rows, and padded
        # output columns are sliced off below.
        w1 = jnp.pad(w1, ((0, D_pad - D), (0, H_pad - H)))
        b1 = jnp.pad(b1, ((0, H_pad - H),))
        w2 = jnp.pad(w2, ((0, H_pad - H), (0, D_pad - D)))
        b2 = jnp.pad(b2, ((0, D_pad - D),))

    b1_2d = b1.reshape(1, H_pad)
    b2_2d = b2.reshape(1, D_pad)
    g1 = jnp.asarray(g, jnp.float32).reshape(1)

    grid = (M_pad // tm_eff, H_pad // th_eff)

    weight_streams = 1 if resident else grid[0]   # W1/W2 re-streamed per row tile
    cost = pl.CostEstimate(
        flops=4 * M_pad * D_pad * H_pad,                     # two matmuls
        transcendentals=M_pad * H_pad,                       # erf / tanh
        bytes_accessed=(x2d.size * x_it
                        + weight_streams * (w1.size + w2.size) * w_it
                        + (b1_2d.size + b2_2d.size) * w_it
                        + M_pad * D_pad * x_it),             # output
    )

    scratch = [] if resident else [pltpu.VMEM((tm_eff, D_pad), jnp.float32)]

    out2d = pl.pallas_call(
        functools.partial(_rezero_ffn_kernel, approx_gelu=approx_gelu),
        out_shape=jax.ShapeDtypeStruct((M_pad, D_pad), x.dtype),
        grid_spec=pltpu.PrefetchScalarGridSpec(
            num_scalar_prefetch=0,
            grid=grid,
            in_specs=[
                pl.BlockSpec((tm_eff, D_pad), lambda i, j: (i, 0)),    # x rows
                pl.BlockSpec((D_pad, th_eff), lambda i, j: (0, j)),    # W1 tile
                pl.BlockSpec((1, th_eff), lambda i, j: (0, j)),        # b1 tile
                pl.BlockSpec((th_eff, D_pad), lambda i, j: (j, 0)),    # W2 tile
                pl.BlockSpec((1, D_pad), lambda i, j: (0, 0)),         # b2
                pl.BlockSpec(memory_space=pltpu.MemorySpace.SMEM),     # g scalar
            ],
            out_specs=pl.BlockSpec((tm_eff, D_pad), lambda i, j: (i, 0)),
            scratch_shapes=scratch,
        ),
        compiler_params=pltpu.CompilerParams(
            dimension_semantics=("parallel", "arbitrary"),
            vmem_limit_bytes=budget),
        cost_estimate=cost,
    )(x2d, w1, b1_2d, w2, b2_2d, g1)

    return out2d[:M, :D].reshape(B, S, D)


def init_params(key, dim, mult=4, dtype=jnp.float32):
    """Deterministic nn.Linear-style init: U(-1/sqrt(fan_in), 1/sqrt(fan_in))."""
    hidden = dim * mult
    k1, k2, k3, k4 = jax.random.split(key, 4)
    bound1 = 1.0 / math.sqrt(dim)
    bound2 = 1.0 / math.sqrt(hidden)
    # Stored pre-transposed: (in_features, out_features)
    w1 = jax.random.uniform(k1, (dim, hidden), dtype, -bound1, bound1)
    b1 = jax.random.uniform(k2, (hidden,), dtype, -bound1, bound1)
    w2 = jax.random.uniform(k3, (hidden, dim), dtype, -bound2, bound2)
    b2 = jax.random.uniform(k4, (dim,), dtype, -bound2, bound2)
    return w1, b1, w2, b2


def rezero_ref(x, w1, b1, w2, b2, g):
    h = jnp.dot(x, w1) + b1
    h = 0.5 * h * (1.0 + jax.lax.erf(h / math.sqrt(2.0)))
    return (jnp.dot(h, w2) + b2) * g


if __name__ == "__main__":
    B, S, dim, mult = 2, 8, 32, 4

    key = jax.random.PRNGKey(0)
    kx, kp = jax.random.split(key)
    x = jax.random.normal(kx, (B, S, dim), dtype=jnp.float32)
    w1, b1, w2, b2 = init_params(kp, dim, mult)
    g = jnp.float32(0.001)   # ReZero learnable scale, PyTorch init value

    # Exact (erf) GELU, f32 — matches the PyTorch module numerically.
    out = jax.block_until_ready(rezero_feed_forward(x, w1, b1, w2, b2, g))
    ref = rezero_ref(x, w1, b1, w2, b2, g)
    assert out.shape == (B, S, dim)
    assert jnp.allclose(out, ref, atol=2e-5, rtol=1e-4), "mismatch vs reference"

    # bf16 path (MXU-native operands, f32 accumulation) — exact GELU.
    xb = x.astype(jnp.bfloat16)
    pb = tuple(p.astype(jnp.bfloat16) for p in (w1, b1, w2, b2))
    out_bf16 = jax.block_until_ready(rezero_feed_forward(xb, *pb, g))
    assert out_bf16.shape == (B, S, dim)

    # Opt-in fast GELU (tanh approx on the EUP, VALU math in the weight dtype).
    out_fast = jax.block_until_ready(
        rezero_feed_forward(xb, *pb, g, approx_gelu=True))
    assert out_fast.shape == (B, S, dim)

    print("KERNEL_OK")
</pallas_src>

<mosaic_0001>
module attributes {stable_mosaic.version = 11 : i64} {
  func.func @_rezero_ffn_kernel(%arg0: i32, %arg1: i32, %arg2: memref<8x128xf32, #tpu.memory_space<vmem>>, %arg3: memref<128x128xf32, #tpu.memory_space<vmem>>, %arg4: memref<1x128xf32, #tpu.memory_space<vmem>>, %arg5: memref<128x128xf32, #tpu.memory_space<vmem>>, %arg6: memref<1x128xf32, #tpu.memory_space<vmem>>, %arg7: memref<1xf32, #tpu.memory_space<smem>>, %arg8: memref<8x128xf32, #tpu.memory_space<vmem>>) attributes {dimension_semantics = [#tpu.dimension_semantics<parallel>, #tpu.dimension_semantics<arbitrary>], iteration_bounds = array<i64: 2, 1>, scalar_prefetch = 0 : i64, scratch_operands = 0 : i64, tpu.core_type = #tpu.core_type<tc>, window_params = [{transform_indices = @transform_0, window_bounds = array<i64: 8, 128>}, {transform_indices = @transform_1, window_bounds = array<i64: 128, 128>}, {transform_indices = @transform_2, window_bounds = array<i64: 1, 128>}, {transform_indices = @transform_3, window_bounds = array<i64: 128, 128>}, {pipeline_mode = #tpu.pipeline_mode<synchronous>, transform_indices = @transform_4, window_bounds = array<i64: 1, 128>}, {transform_indices = @transform_5, window_bounds = array<i64: 1>}, {transform_indices = @transform_6, window_bounds = array<i64: 8, 128>}]} {
    %c0 = arith.constant 0 : index
    %c0_0 = arith.constant 0 : index
    %0 = vector.load %arg2[%c0, %c0_0] : memref<8x128xf32, #tpu.memory_space<vmem>>, vector<8x128xf32>
    %c0_1 = arith.constant 0 : index
    %c0_2 = arith.constant 0 : index
    %1 = vector.load %arg3[%c0_1, %c0_2] : memref<128x128xf32, #tpu.memory_space<vmem>>, vector<128x128xf32>
    %cst = arith.constant dense<0.000000e+00> : vector<8x128xf32>
    %2 = tpu.matmul %0, %1, %cst {dimension_numbers = #tpu.dot_dimension_numbers<[1], [0], [0], [1], [0, 0, 1, 1], [], []>} : vector<8x128xf32>, vector<128x128xf32>, vector<8x128xf32> -> vector<8x128xf32>
    %c0_3 = arith.constant 0 : index
    %c0_4 = arith.constant 0 : index
    %3 = vector.load %arg4[%c0_3, %c0_4] : memref<1x128xf32, #tpu.memory_space<vmem>>, vector<1x128xf32>
    %4 = vector.broadcast %3 : vector<1x128xf32> to vector<8x128xf32>
    %5 = arith.addf %2, %4 : vector<8x128xf32>
    %cst_5 = arith.constant 5.000000e-01 : f32
    %6 = vector.broadcast %cst_5 : f32 to vector<8x128xf32>
    %7 = arith.mulf %6, %5 : vector<8x128xf32>
    %cst_6 = arith.constant 0.707106769 : f32
    %8 = vector.broadcast %cst_6 : f32 to vector<8x128xf32>
    %9 = arith.mulf %5, %8 : vector<8x128xf32>
    %10 = math.erf %9 : vector<8x128xf32>
    %cst_7 = arith.constant 1.000000e+00 : f32
    %11 = vector.broadcast %cst_7 : f32 to vector<8x128xf32>
    %12 = arith.addf %11, %10 : vector<8x128xf32>
    %13 = arith.mulf %7, %12 : vector<8x128xf32>
    %c0_8 = arith.constant 0 : index
    %c0_9 = arith.constant 0 : index
    %14 = vector.load %arg5[%c0_8, %c0_9] : memref<128x128xf32, #tpu.memory_space<vmem>>, vector<128x128xf32>
    %cst_10 = arith.constant dense<0.000000e+00> : vector<8x128xf32>
    %15 = tpu.matmul %13, %14, %cst_10 {dimension_numbers = #tpu.dot_dimension_numbers<[1], [0], [0], [1], [0, 0, 1, 1], [], []>} : vector<8x128xf32>, vector<128x128xf32>, vector<8x128xf32> -> vector<8x128xf32>
    %c0_11 = arith.constant 0 : index
    %c0_12 = arith.constant 0 : index
    %16 = vector.load %arg6[%c0_11, %c0_12] : memref<1x128xf32, #tpu.memory_space<vmem>>, vector<1x128xf32>
    %17 = vector.broadcast %16 : vector<1x128xf32> to vector<8x128xf32>
    %18 = arith.addf %15, %17 : vector<8x128xf32>
    %c0_13 = arith.constant 0 : index
    %19 = memref.load %arg7[%c0_13] : memref<1xf32, #tpu.memory_space<smem>>
    %20 = vector.broadcast %19 : f32 to vector<8x128xf32>
    %21 = arith.mulf %18, %20 : vector<8x128xf32>
    %c0_14 = arith.constant 0 : index
    %c0_15 = arith.constant 0 : index
    %22 = vector.load %arg8[%c0_14, %c0_15] : memref<8x128xf32, #tpu.memory_space<vmem>>, vector<8x128xf32>
    tpu.vector_store %arg8[%c0_14, %c0_15], %21 {strides = array<i32>} : memref<8x128xf32, #tpu.memory_space<vmem>>, vector<8x128xf32>,
    return
  }
  func.func @transform_0(%arg0: i32, %arg1: i32) -> (i32, i32) {
    %c0_i32 = arith.constant 0 : i32
    %c0_i32_0 = arith.constant 0 : i32
    return %arg0, %c0_i32 : i32, i32
  }
  func.func @transform_1(%arg0: i32, %arg1: i32) -> (i32, i32) {
    %c0_i32 = arith.constant 0 : i32
    %c0_i32_0 = arith.constant 0 : i32
    return %c0_i32, %arg1 : i32, i32
  }
  func.func @transform_2(%arg0: i32, %arg1: i32) -> (i32, i32) {
    %c0_i32 = arith.constant 0 : i32
    %c0_i32_0 = arith.constant 0 : i32
    return %c0_i32, %arg1 : i32, i32
  }
  func.func @transform_3(%arg0: i32, %arg1: i32) -> (i32, i32) {
    %c0_i32 = arith.constant 0 : i32
    %c0_i32_0 = arith.constant 0 : i32
    return %arg1, %c0_i32 : i32, i32
  }
  func.func @transform_4(%arg0: i32, %arg1: i32) -> (i32, i32) {
    %c0_i32 = arith.constant 0 : i32
    %c0_i32_0 = arith.constant 0 : i32
    %c0_i32_1 = arith.constant 0 : i32
    return %c0_i32, %c0_i32_0 : i32, i32
  }
  func.func @transform_5(%arg0: i32, %arg1: i32) -> i32 {
    %c0_i32 = arith.constant 0 : i32
    %c0_i32_0 = arith.constant 0 : i32
    return %c0_i32 : i32
  }
  func.func @transform_6(%arg0: i32, %arg1: i32) -> (i32, i32) {
    %c0_i32 = arith.constant 0 : i32
    %c0_i32_0 = arith.constant 0 : i32
    return %arg0, %c0_i32 : i32, i32
  }
}

</mosaic_0001>

<llo_original>
// kernel: rezero_feed_forward.1
$region0: #{rezero_feed_forward.1}
  #allocation0 [shape = 'u32[]', space=smem, size = 0x4, offset = 0x4, fixed_abs, tag = 'smem constant byte address 0x4 - core index']
  #allocation1 [shape = 'u32[144,128]{1,0:T(1,128)}', space=vmem, size = 0x12000, scoped, tag = 'internal scratch']
  #allocation2 [shape = 'f32[1]{0:T(128)S(6)}', space=smem, size = 0x200, scoped, tag = 'scoped memory for rezero_feed_forward.1']
  %s0 = inlined_call_operand.vmem [shape: f32[16,128], index: 0, kind: input, shape index: {}]
  %s1 = inlined_call_operand.vmem [shape: f32[128,128], index: 1, kind: input, shape index: {}]
  %s2 = inlined_call_operand.vmem [shape: f32[1,128], index: 2, kind: input, shape index: {}]
  %s3 = inlined_call_operand.vmem [shape: f32[128,128], index: 3, kind: input, shape index: {}]
  %s4 = inlined_call_operand.vmem [shape: f32[1,128], index: 4, kind: input, shape index: {}]
  %s5 = inlined_call_operand.<no memory space> [shape: f32[1], index: 5, kind: input, shape index: {}]
  %s6 = inlined_call_operand.vmem [shape: f32[16,128], index: 6, kind: output, shape index: {}]
  %s7 = sld [smem:[#allocation0]]
  $region57: #{rezero_feed_forward.1} parent=0
    _
  %s9 = ssub.s32 1, %s7
  %s10 = scalar_select 0, %s9, %s7
  %11 = sst [smem:[#allocation2]] %s5
  loop: start=0, step=1, limit=4
  $region2: #{rezero_feed_forward.1} parent=0 // loop_pre_header
    _
  $region3: #{rezero_feed_forward.1} parent=0 // loop_header
    %s13 = sphi 0, %s17
    %p14 = scmp.ge.s32.totalorder %s13, 4
    %s20 = sphi 0, %s32
    %s21 = sphi 0, %s28
    %s22 = sphi 0, %s20
    %s23 = sphi 0, %s21
    %s24 = sphi 0, %s22
    %s25 = sphi 0, %s23
    %s35 = sphi 0, %s37
    %s38 = sphi 0, %s35
    %s39 = sphi 0, %s38
    %s55 = sphi 0, %s39
    %s61 = sphi 0, %s63
    %s64 = sphi 0, %s61
    %s65 = sphi 0, %s64
    %s81 = sphi 0, %s65
    %s87 = sphi 0, %s89
    %s90 = sphi 0, %s87
    %s91 = sphi 0, %s90
    %s107 = sphi 0, %s91
    %s113 = sphi 0, %s115
    %s116 = sphi 0, %s113
    %s117 = sphi 0, %s116
    %s133 = sphi 0, %s117
    %s137 = sphi 0, %s137
    %s139 = sphi 0, %s137
    %s140 = sphi 0, %s139
    %s154 = sphi 0, %s140
    %s158 = sphi 0, %s158
    %s160 = sphi 0, %s158
    %s161 = sphi 0, %s160
    %s175 = sphi 0, %s161
    %s181 = sphi 0, %s183
    %s184 = sphi 0, %s181
    %s185 = sphi 0, %s184
    %s201 = sphi 0, %s185
  $region4: #{rezero_feed_forward.1} parent=0 // loop_header_branch
    %16 = sbr.rel (%p14) target = $region8
  $region5: #{rezero_feed_forward.1} parent=0 // loop_body
    %s18 = ssub.s32 %s13, 1
    %s19 = ssub.s32 %s13, 2
    %s26 = sadd.s32 1, %s21
    %p27 = scmp.ge.s32.totalorder %s26, 1
    %s28 = scalar_select %p27, 0, %s26
    %s29 = sadd.s32 1, %s20
    %s30 = scalar_select %p27, %s29, %s20
    %p31 = scmp.ge.s32.totalorder %s30, 2
    %s32 = scalar_select %p31, 0, %s30
    %s33 = ssub.s32 %s20, %s32
    %p34 = scmp.eq.s32.totalorder %s33, 0
    %s36 = sadd.s32 %s35, 1
    %s37 = scalar_select %p34, %s35, %s36
    %p40 = pneg %p34
    %p41 = scmp.eq.s32.totalorder %s13, 1
    %p42 = por %p40, %p41
    %p43 = scmp.ne.s32.totalorder %s35, %s38
    %p44 = scmp.eq.s32.totalorder %s13, 0
    %p45 = por %p43, %p44
    %p46 = scmp.ne.s32.totalorder %s35, %s38
    %p47 = scmp.eq.s32.totalorder %s18, 1
    %p48 = por %p46, %p47
    %p49 = scmp.ne.s32.totalorder %s38, %s39
    %p50 = scmp.eq.s32.totalorder %s18, 0
    %p51 = por %p49, %p50
    %p52 = scmp.ne.s32.totalorder %s38, %s39
    %p53 = scmp.eq.s32.totalorder %s19, 1
    %p54 = por %p52, %p53
    %p56 = scmp.ne.s32.totalorder %s39, %s55
    %p57 = scmp.eq.s32.totalorder %s19, 0
    %p58 = por %p56, %p57
    %s59 = ssub.s32 %s21, %s28
    %p60 = scmp.eq.s32.totalorder %s59, 0
    %s62 = sadd.s32 %s61, 1
    %s63 = scalar_select %p60, %s61, %s62
    %p66 = pneg %p60
    %p67 = scmp.eq.s32.totalorder %s13, 1
    %p68 = por %p66, %p67
    %p69 = scmp.ne.s32.totalorder %s61, %s64
    %p70 = scmp.eq.s32.totalorder %s13, 0
    %p71 = por %p69, %p70
    %p72 = scmp.ne.s32.totalorder %s61, %s64
    %p73 = scmp.eq.s32.totalorder %s18, 1
    %p74 = por %p72, %p73
    %p75 = scmp.ne.s32.totalorder %s64, %s65
    %p76 = scmp.eq.s32.totalorder %s18, 0
    %p77 = por %p75, %p76
    %p78 = scmp.ne.s32.totalorder %s64, %s65
    %p79 = scmp.eq.s32.totalorder %s19, 1
    %p80 = por %p78, %p79
    %p82 = scmp.ne.s32.totalorder %s65, %s81
    %p83 = scmp.eq.s32.totalorder %s19, 0
    %p84 = por %p82, %p83
    %s85 = ssub.s32 %s21, %s28
    %p86 = scmp.eq.s32.totalorder %s85, 0
    %s88 = sadd.s32 %s87, 1
    %s89 = scalar_select %p86, %s87, %s88
    %p92 = pneg %p86
    %p93 = scmp.eq.s32.totalorder %s13, 1
    %p94 = por %p92, %p93
    %p95 = scmp.ne.s32.totalorder %s87, %s90
    %p96 = scmp.eq.s32.totalorder %s13, 0
    %p97 = por %p95, %p96
    %p98 = scmp.ne.s32.totalorder %s87, %s90
    %p99 = scmp.eq.s32.totalorder %s18, 1
    %p100 = por %p98, %p99
    %p101 = scmp.ne.s32.totalorder %s90, %s91
    %p102 = scmp.eq.s32.totalorder %s18, 0
    %p103 = por %p101, %p102
    %p104 = scmp.ne.s32.totalorder %s90, %s91
    %p105 = scmp.eq.s32.totalorder %s19, 1
    %p106 = por %p104, %p105
    %p108 = scmp.ne.s32.totalorder %s91, %s107
    %p109 = scmp.eq.s32.totalorder %s19, 0
    %p110 = por %p108, %p109
    %s111 = ssub.s32 %s21, %s28
    %p112 = scmp.eq.s32.totalorder %s111, 0
    %s114 = sadd.s32 %s113, 1
    %s115 = scalar_select %p112, %s113, %s114
    %p118 = pneg %p112
    %p119 = scmp.eq.s32.totalorder %s13, 1
    %p120 = por %p118, %p119
    %p121 = scmp.ne.s32.totalorder %s113, %s116
    %p122 = scmp.eq.s32.totalorder %s13, 0
    %p123 = por %p121, %p122
    %p124 = scmp.ne.s32.totalorder %s113, %s116
    %p125 = scmp.eq.s32.totalorder %s18, 1
    %p126 = por %p124, %p125
    %p127 = scmp.ne.s32.totalorder %s116, %s117
    %p128 = scmp.eq.s32.totalorder %s18, 0
    %p129 = por %p127, %p128
    %p130 = scmp.ne.s32.totalorder %s116, %s117
    %p131 = scmp.eq.s32.totalorder %s19, 1
    %p132 = por %p130, %p131
    %p134 = scmp.ne.s32.totalorder %s117, %s133
    %p135 = scmp.eq.s32.totalorder %s19, 0
    %p136 = por %p134, %p135
    %s138 = sadd.s32 %s137, 1
    %p141 = scmp.eq.s32.totalorder %s13, 1
    %p142 = scmp.ne.s32.totalorder %s137, %s139
    %p143 = scmp.eq.s32.totalorder %s13, 0
    %p144 = por %p142, %p143
    %p145 = scmp.ne.s32.totalorder %s137, %s139
    %p146 = scmp.eq.s32.totalorder %s18, 1
    %p147 = por %p145, %p146
    %p148 = scmp.ne.s32.totalorder %s139, %s140
    %p149 = scmp.eq.s32.totalorder %s18, 0
    %p150 = por %p148, %p149
    %p151 = scmp.ne.s32.totalorder %s139, %s140
    %p152 = scmp.eq.s32.totalorder %s19, 1
    %p153 = por %p151, %p152
    %p155 = scmp.ne.s32.totalorder %s140, %s154
    %p156 = scmp.eq.s32.totalorder %s19, 0
    %p157 = por %p155, %p156
    %s159 = sadd.s32 %s158, 1
    %p162 = scmp.eq.s32.totalorder %s13, 1
    %p163 = scmp.ne.s32.totalorder %s158, %s160
    %p164 = scmp.eq.s32.totalorder %s13, 0
    %p165 = por %p163, %p164
    %p166 = scmp.ne.s32.totalorder %s158, %s160
    %p167 = scmp.eq.s32.totalorder %s18, 1
    %p168 = por %p166, %p167
    %p169 = scmp.ne.s32.totalorder %s160, %s161
    %p170 = scmp.eq.s32.totalorder %s18, 0
    %p171 = por %p169, %p170
    %p172 = scmp.ne.s32.totalorder %s160, %s161
    %p173 = scmp.eq.s32.totalorder %s19, 1
    %p174 = por %p172, %p173
    %p176 = scmp.ne.s32.totalorder %s161, %s175
    %p177 = scmp.eq.s32.totalorder %s19, 0
    %p178 = por %p176, %p177
    %s179 = ssub.s32 %s20, %s32
    %p180 = scmp.eq.s32.totalorder %s179, 0
    %s182 = sadd.s32 %s181, 1
    %s183 = scalar_select %p180, %s181, %s182
    %p186 = pneg %p180
    %p187 = scmp.eq.s32.totalorder %s13, 1
    %p188 = por %p186, %p187
    %p189 = scmp.ne.s32.totalorder %s181, %s184
    %p190 = scmp.eq.s32.totalorder %s13, 0
    %p191 = por %p189, %p190
    %p192 = scmp.ne.s32.totalorder %s181, %s184
    %p193 = scmp.eq.s32.totalorder %s18, 1
    %p194 = por %p192, %p193
    %p195 = scmp.ne.s32.totalorder %s184, %s185
    %p196 = scmp.eq.s32.totalorder %s18, 0
    %p197 = por %p195, %p196
    %p198 = scmp.ne.s32.totalorder %s184, %s185
    %p199 = scmp.eq.s32.totalorder %s19, 1
    %p200 = por %p198, %p199
    %p202 = scmp.ne.s32.totalorder %s185, %s201
    %p203 = scmp.eq.s32.totalorder %s19, 0
    %p204 = por %p202, %p203
    %p205 = scmp.le.s32.totalorder 1, %s13
    %p206 = scmp.lt.s32.totalorder %s13, 3
    %p207 = pnand %p205, %p206
    %p208 = pneg %p207
    // Predicated region
    $region9: #{rezero_feed_forward.1} parent=5 // pred_check
      _
    $region10: #{rezero_feed_forward.1} parent=5 // pred_check_branch
      %210 = sbr.rel (%p207) target = $region12
    $region11: #{rezero_feed_forward.1} parent=5 // pred_region
      %s211 = ssub.s32 %s13, 1
      // Predicated region
      $region13: #{rezero_feed_forward.1} parent=11 // pred_check
        %p212 = pneg %p77
      $region14: #{rezero_feed_forward.1} parent=11 // pred_check_branch
        %214 = sbr.rel (%p212) target = $region16
      $region15: #{rezero_feed_forward.1} parent=11 // pred_region
        %p215 = scmp.lt.s32.totalorder %s23, 0
        %s216 = scalar_select %p215, %s23, 0
        %s217 = smul.addr %s216, 8
        %s218 = scalar_lea.vmem %s1, %s217
      $region16: #{rezero_feed_forward.1} parent=11 // pred_fallthru
        _
      // Predicated region
      $region17: #{rezero_feed_forward.1} parent=11 // pred_check
        %p219 = pneg %p103
      $region18: #{rezero_feed_forward.1} parent=11 // pred_check_branch
        %221 = sbr.rel (%p219) target = $region20
      $region19: #{rezero_feed_forward.1} parent=11 // pred_region
        %p222 = scmp.lt.s32.totalorder %s23, 0
        %s223 = scalar_select %p222, %s23, 0
        %s224 = scalar_lea.vmem %s2, %s223
      $region20: #{rezero_feed_forward.1} parent=11 // pred_fallthru
        _
      // Predicated region
      $region21: #{rezero_feed_forward.1} parent=11 // pred_check
        %p225 = pneg %p129
      $region22: #{rezero_feed_forward.1} parent=11 // pred_check_branch
        %227 = sbr.rel (%p225) target = $region24
      $region23: #{rezero_feed_forward.1} parent=11 // pred_region
        %s228 = smul.u32 16, %s23
        %p229 = scmp.lt.s32.totalorder %s228, 15
        %s230 = scalar_select %p229, %s228, 15
        %s231 = smul.addr %s230, 8
        %s232 = scalar_lea.vmem %s3, %s231
        %s233 = smul.u32 16, %s23
      $region24: #{rezero_feed_forward.1} parent=11 // pred_fallthru
        _
      // Predicated region
      $region25: #{rezero_feed_forward.1} parent=11 // pred_check
        %p234 = pneg %p150
      $region26: #{rezero_feed_forward.1} parent=11 // pred_check_branch
        %236 = sbr.rel (%p234) target = $region28
      $region27: #{rezero_feed_forward.1} parent=11 // pred_region
        _
      $region28: #{rezero_feed_forward.1} parent=11 // pred_fallthru
        _
      // Predicated region
      $region29: #{rezero_feed_forward.1} parent=11 // pred_check
        %p237 = pneg %p171
      $region30: #{rezero_feed_forward.1} parent=11 // pred_check_branch
        %239 = sbr.rel (%p237) target = $region32
      $region31: #{rezero_feed_forward.1} parent=11 // pred_region
        _
      $region32: #{rezero_feed_forward.1} parent=11 // pred_fallthru
        _
    $region12: #{rezero_feed_forward.1} parent=5 // pred_fallthru
      _
    %p240 = scmp.lt.s32.totalorder %s13, 2
    // Predicated region
    $region33: #{rezero_feed_forward.1} parent=5 // pred_check
      %p241 = pneg %p240
    $region34: #{rezero_feed_forward.1} parent=5 // pred_check_branch
      %243 = sbr.rel (%p241) target = $region36
    $region35: #{rezero_feed_forward.1} parent=5 // pred_region
      // Predicated region
      $region37: #{rezero_feed_forward.1} parent=35 // pred_check
        %p244 = pneg %p45
      $region38: #{rezero_feed_forward.1} parent=35 // pred_check_branch
        %246 = sbr.rel (%p244) target = $region40
      $region39: #{rezero_feed_forward.1} parent=35 // pred_region
        %p247 = scmp.lt.s32.totalorder %s20, 1
        %s248 = scalar_select %p247, %s20, 1
        %s249 = smul.addr %s248, 8
        %s250 = scalar_lea.vmem %s0, %s249
      $region40: #{rezero_feed_forward.1} parent=35 // pred_fallthru
        _
    $region36: #{rezero_feed_forward.1} parent=5 // pred_fallthru
      _
    %p251 = scmp.le.s32.totalorder 1, %s13
    %p252 = scmp.lt.s32.totalorder %s13, 3
    %p253 = pnand %p251, %p252
    %p254 = pneg %p253
    // Predicated region
    $region41: #{rezero_feed_forward.1} parent=5 // pred_check
      _
    $region42: #{rezero_feed_forward.1} parent=5 // pred_check_branch
      %256 = sbr.rel (%p253) target = $region44
    $region43: #{rezero_feed_forward.1} parent=5 // pred_region
      %s257 = ssub.s32 %s13, 1
      %p258 = scmp.lt.s32.totalorder %s22, 1
      %s259 = scalar_select %p258, %s22, 1
      %s260 = smul.addr %s259, 8
      %s261 = scalar_lea.vmem %s0, %s260
      %p262 = pneg %p51
      %p263 = pneg %p48
      %p264 = scmp.lt.s32.totalorder %s23, 0
      %s265 = scalar_select %p264, %s23, 0
      %s266 = smul.addr %s265, 8
      %s267 = scalar_lea.vmem %s1, %s266
      %p268 = pneg %p77
      %p269 = pneg %p74
      %p270 = scmp.lt.s32.totalorder %s23, 0
      %s271 = scalar_select %p270, %s23, 0
      %s272 = scalar_lea.vmem %s2, %s271
      %p273 = pneg %p103
      %p274 = pneg %p100
      %s275 = smul.u32 16, %s23
      %p276 = scmp.lt.s32.totalorder %s275, 15
      %s277 = scalar_select %p276, %s275, 15
      %s278 = smul.addr %s277, 8
      %s279 = scalar_lea.vmem %s3, %s278
      %p280 = pneg %p129
      %p281 = pneg %p126
      %p282 = pneg %p150
      %p283 = pneg %p147
      %p284 = pneg %p171
      %p285 = pneg %p168
      %p286 = pneg %p197
      %p287 = pneg %p194
      %p288 = scmp.lt.s32.totalorder %s22, 1
      %s289 = scalar_select %p288, %s22, 1
      %s290 = smul.addr %s289, 8
      %s291 = scalar_lea.vmem %s6, %s290
      %p292 = scmp.lt.s32.totalorder %s22, 1
      %s293 = scalar_select %p292, %s22, 1
      %s294 = smul.addr %s293, 8
      %s295 = scalar_lea.vmem %s0, %s294
      %p296 = scmp.lt.s32.totalorder %s23, 0
      %s297 = scalar_select %p296, %s23, 0
      %s298 = smul.addr %s297, 8
      %s299 = scalar_lea.vmem %s1, %s298
      %p300 = scmp.lt.s32.totalorder %s23, 0
      %s301 = scalar_select %p300, %s23, 0
      %s302 = scalar_lea.vmem %s2, %s301
      %s303 = smul.u32 16, %s23
      %p304 = scmp.lt.s32.totalorder %s303, 15
      %s305 = scalar_select %p304, %s303, 15
      %s306 = smul.addr %s305, 8
      %s307 = scalar_lea.vmem %s3, %s306
      %s308 = smul.u32 16, %s23
      %p309 = scmp.lt.s32.totalorder %s22, 1
      %s310 = scalar_select %p309, %s22, 1
      %s311 = smul.addr %s310, 8
      %s312 = scalar_lea.vmem %s6, %s311
      %v313 = vld [vmem:[%s295] sm:$0xff]
      %v314 = vld [vmem:[%s299] sm:$0xff]
      %v315 = vld [vmem:[%s299 + $0x8] sm:$0xff]
      %v316 = vld [vmem:[%s299 + $0x10] sm:$0xff]
      %v317 = vld [vmem:[%s299 + $0x18] sm:$0xff]
      %v318 = vld [vmem:[%s299 + $0x20] sm:$0xff]
      %v319 = vld [vmem:[%s299 + $0x28] sm:$0xff]
      %v320 = vld [vmem:[%s299 + $0x30] sm:$0xff]
      %v321 = vld [vmem:[%s299 + $0x38] sm:$0xff]
      %v322 = vld [vmem:[%s299 + $0x40] sm:$0xff]
      %v323 = vld [vmem:[%s299 + $0x48] sm:$0xff]
      %v324 = vld [vmem:[%s299 + $0x50] sm:$0xff]
      %v325 = vld [vmem:[%s299 + $0x58] sm:$0xff]
      %v326 = vld [vmem:[%s299 + $0x60] sm:$0xff]
      %v327 = vld [vmem:[%s299 + $0x68] sm:$0xff]
      %v328 = vld [vmem:[%s299 + $0x70] sm:$0xff]
      %v329 = vld [vmem:[%s299 + $0x78] sm:$0xff]
      %v330 = vld [vmem:[%s302] sm:$0x1]
      %v332 = vlaneseq
      %v333 = vshrl.u32 %v332, 7
      %v334 = vsub.s32 0, %v333
      %v335 = vrot.slane %v330, %v334
      %337 = vmatprep.subr.mxu0 0.0
      %338 = vmatpush1.msra.mxu0 %v329
      %339 = vmatprep.subr.mxu0 0.0
      %340 = vmatpush1.msra.mxu0 %v328
      %341 = vmatprep.subr.mxu0 0.0
      %342 = vmatpush1.msra.mxu0 %v327
      %343 = vmatprep.subr.mxu0 0.0
      %344 = vmatpush1.msra.mxu0 %v326
      %345 = vmatprep.subr.mxu0 0.0
      %346 = vmatpush1.msra.mxu0 %v325
      %347 = vmatprep.subr.mxu0 0.0
      %348 = vmatpush1.msra.mxu0 %v324
      %349 = vmatprep.subr.mxu0 0.0
      %350 = vmatpush1.msra.mxu0 %v323
      %351 = vmatprep.subr.mxu0 0.0
      %352 = vmatpush1.msra.mxu0 %v322
      %353 = vmatprep.subr.mxu0 0.0
      %354 = vmatpush1.msra.mxu0 %v321
      %355 = vmatprep.subr.mxu0 0.0
      %356 = vmatpush1.msra.mxu0 %v320
      %357 = vmatprep.subr.mxu0 0.0
      %358 = vmatpush1.msra.mxu0 %v319
      %359 = vmatprep.subr.mxu0 0.0
      %360 = vmatpush1.msra.mxu0 %v318
      %361 = vmatprep.subr.mxu0 0.0
      %362 = vmatpush1.msra.mxu0 %v317
      %363 = vmatprep.subr.mxu0 0.0
      %364 = vmatpush1.msra.mxu0 %v316
      %365 = vmatprep.subr.mxu0 0.0
      %366 = vmatpush1.msra.mxu0 %v315
      %367 = vmatprep.subr.mxu0 0.0
      %368 = vmatpush1.msra.mxu0 %v314
      %369 = vmatprep.subr.mxu0 0.0
      %370 = vmatpush2.msra.mxu0 0.0
      %371 = vmatprep.subr.mxu0 0.0
      %372 = vmatpush2.msra.mxu0 0.0
      %373 = vmatprep.subr.mxu0 0.0
      %374 = vmatpush2.msra.mxu0 0.0
      %375 = vmatprep.subr.mxu0 0.0
      %376 = vmatpush2.msra.mxu0 0.0
      %377 = vmatprep.subr.mxu0 0.0
      %378 = vmatpush2.msra.mxu0 0.0
      %379 = vmatprep.subr.mxu0 0.0
      %380 = vmatpush2.msra.mxu0 0.0
      %381 = vmatprep.subr.mxu0 0.0
      %382 = vmatpush2.msra.mxu0 0.0
      %383 = vmatprep.subr.mxu0 0.0
      %384 = vmatpush2.msra.mxu0 0.0
      %385 = vmatprep.subr.mxu0 0.0
      %386 = vmatpush2.msra.mxu0 0.0
      %387 = vmatprep.subr.mxu0 0.0
      %388 = vmatpush2.msra.mxu0 0.0
      %389 = vmatprep.subr.mxu0 0.0
      %390 = vmatpush2.msra.mxu0 0.0
      %391 = vmatprep.subr.mxu0 0.0
      %392 = vmatpush2.msra.mxu0 0.0
      %393 = vmatprep.subr.mxu0 0.0
      %394 = vmatpush2.msra.mxu0 0.0
      %395 = vmatprep.subr.mxu0 0.0
      %396 = vmatpush2.msra.mxu0 0.0
      %397 = vmatprep.subr.mxu0 0.0
      %398 = vmatpush2.msra.mxu0 0.0
      %399 = vmatprep.subr.mxu0 0.0
      %400 = vmatpush2.msra.mxu0 0.0
      %401 = vmatprep.mubr.f32.mxu0 0.0
      %402 = vmatmul.mubr.f32.gmra.mxu0 %v313
      %v403 = vpop.f32.mrf.mxu0
      %v404 = vadd.f32 %v335, %v403
      %v405 = vpop.f32.mrf.mxu0
      %406 = vdwg.mxu0
      %v407 = vmul.f32 %v404, 0.5
      %v408 = vmul.f32 %v404, 0.70710677
      %v409 = verf.f32.pop %v408
      %v410 = vadd.f32 %v409, 1.0
      %v411 = vmul.f32 %v407, %v410
      %v412 = vld [vmem:[%s307] sm:$0xff]
      %v413 = vld [vmem:[%s307 + $0x8] sm:$0xff]
      %v414 = vld [vmem:[%s307 + $0x10] sm:$0xff]
      %v415 = vld [vmem:[%s307 + $0x18] sm:$0xff]
      %v416 = vld [vmem:[%s307 + $0x20] sm:$0xff]
      %v417 = vld [vmem:[%s307 + $0x28] sm:$0xff]
      %v418 = vld [vmem:[%s307 + $0x30] sm:$0xff]
      %v419 = vld [vmem:[%s307 + $0x38] sm:$0xff]
      %v420 = vld [vmem:[%s307 + $0x40] sm:$0xff]
      %v421 = vld [vmem:[%s307 + $0x48] sm:$0xff]
      %v422 = vld [vmem:[%s307 + $0x50] sm:$0xff]
      %v423 = vld [vmem:[%s307 + $0x58] sm:$0xff]
      %v424 = vld [vmem:[%s307 + $0x60] sm:$0xff]
      %v425 = vld [vmem:[%s307 + $0x68] sm:$0xff]
      %v426 = vld [vmem:[%s307 + $0x70] sm:$0xff]
      %v427 = vld [vmem:[%s307 + $0x78] sm:$0xff]
      %v428 = vld [vmem:[%s4] sm:$0x1]
      %v430 = vlaneseq
      %v431 = vshrl.u32 %v430, 7
      %v432 = vsub.s32 0, %v431
      %v433 = vrot.slane %v428, %v432
      %435 = vmatprep.subr.mxu0 0.0
      %436 = vmatpush1.msra.mxu0 %v427
      %437 = vmatprep.subr.mxu0 0.0
      %438 = vmatpush1.msra.mxu0 %v426
      %439 = vmatprep.subr.mxu0 0.0
      %440 = vmatpush1.msra.mxu0 %v425
      %441 = vmatprep.subr.mxu0 0.0
      %442 = vmatpush1.msra.mxu0 %v424
      %443 = vmatprep.subr.mxu0 0.0
      %444 = vmatpush1.msra.mxu0 %v423
      %445 = vmatprep.subr.mxu0 0.0
      %446 = vmatpush1.msra.mxu0 %v422
      %447 = vmatprep.subr.mxu0 0.0
      %448 = vmatpush1.msra.mxu0 %v421
      %449 = vmatprep.subr.mxu0 0.0
      %450 = vmatpush1.msra.mxu0 %v420
      %451 = vmatprep.subr.mxu0 0.0
      %452 = vmatpush1.msra.mxu0 %v419
      %453 = vmatprep.subr.mxu0 0.0
      %454 = vmatpush1.msra.mxu0 %v418
      %455 = vmatprep.subr.mxu0 0.0
      %456 = vmatpush1.msra.mxu0 %v417
      %457 = vmatprep.subr.mxu0 0.0
      %458 = vmatpush1.msra.mxu0 %v416
      %459 = vmatprep.subr.mxu0 0.0
      %460 = vmatpush1.msra.mxu0 %v415
      %461 = vmatprep.subr.mxu0 0.0
      %462 = vmatpush1.msra.mxu0 %v414
      %463 = vmatprep.subr.mxu0 0.0
      %464 = vmatpush1.msra.mxu0 %v413
      %465 = vmatprep.subr.mxu0 0.0
      %466 = vmatpush1.msra.mxu0 %v412
      %467 = vmatprep.subr.mxu0 0.0
      %468 = vmatpush2.msra.mxu0 0.0
      %469 = vmatprep.subr.mxu0 0.0
      %470 = vmatpush2.msra.mxu0 0.0
      %471 = vmatprep.subr.mxu0 0.0
      %472 = vmatpush2.msra.mxu0 0.0
      %473 = vmatprep.subr.mxu0 0.0
      %474 = vmatpush2.msra.mxu0 0.0
      %475 = vmatprep.subr.mxu0 0.0
      %476 = vmatpush2.msra.mxu0 0.0
      %477 = vmatprep.subr.mxu0 0.0
      %478 = vmatpush2.msra.mxu0 0.0
      %479 = vmatprep.subr.mxu0 0.0
      %480 = vmatpush2.msra.mxu0 0.0
      %481 = vmatprep.subr.mxu0 0.0
      %482 = vmatpush2.msra.mxu0 0.0
      %483 = vmatprep.subr.mxu0 0.0
      %484 = vmatpush2.msra.mxu0 0.0
      %485 = vmatprep.subr.mxu0 0.0
      %486 = vmatpush2.msra.mxu0 0.0
      %487 = vmatprep.subr.mxu0 0.0
      %488 = vmatpush2.msra.mxu0 0.0
      %489 = vmatprep.subr.mxu0 0.0
      %490 = vmatpush2.msra.mxu0 0.0
      %491 = vmatprep.subr.mxu0 0.0
      %492 = vmatpush2.msra.mxu0 0.0
      %493 = vmatprep.subr.mxu0 0.0
      %494 = vmatpush2.msra.mxu0 0.0
      %495 = vmatprep.subr.mxu0 0.0
      %496 = vmatpush2.msra.mxu0 0.0
      %497 = vmatprep.subr.mxu0 0.0
      %498 = vmatpush2.msra.mxu0 0.0
      %499 = vmatprep.mubr.f32.mxu0 0.0
      %500 = vmatmul.mubr.f32.gmra.mxu0 %v411
      %v501 = vpop.f32.mrf.mxu0
      %v502 = vadd.f32 %v433, %v501
      %v503 = vpop.f32.mrf.mxu0
      %504 = vdwg.mxu0
      %s505 = sld [smem:[#allocation2]]
      %v506 = vstv %s505
      %v507 = vmul.f32 %v502, %v506
      %508 = vst [vmem:[%s312] sm:$0xff] %v507
      %p509 = scmp.lt.s32.totalorder %s22, 1
      %s510 = scalar_select %p509, %s22, 1
      %s511 = smul.addr %s510, 8
      %s512 = scalar_lea.vmem %s6, %s511
      // Predicated region
      $region45: #{rezero_feed_forward.1} parent=43 // pred_check
        %p513 = pneg %p194
      $region46: #{rezero_feed_forward.1} parent=43 // pred_check_branch
        %515 = sbr.rel (%p513) target = $region48
      $region47: #{rezero_feed_forward.1} parent=43 // pred_region
        _
      $region48: #{rezero_feed_forward.1} parent=43 // pred_fallthru
        _
    $region44: #{rezero_feed_forward.1} parent=5 // pred_fallthru
      _
    %p516 = scmp.le.s32.totalorder 2, %s13
    // Predicated region
    $region49: #{rezero_feed_forward.1} parent=5 // pred_check
      %p517 = pneg %p516
    $region50: #{rezero_feed_forward.1} parent=5 // pred_check_branch
      %519 = sbr.rel (%p517) target = $region52
    $region51: #{rezero_feed_forward.1} parent=5 // pred_region
      %s520 = ssub.s32 %s13, 2
      // Predicated region
      $region53: #{rezero_feed_forward.1} parent=51 // pred_check
        %p521 = pneg %p200
      $region54: #{rezero_feed_forward.1} parent=51 // pred_check_branch
        %523 = sbr.rel (%p521) target = $region56
      $region55: #{rezero_feed_forward.1} parent=51 // pred_region
        %p524 = scmp.lt.s32.totalorder %s24, 1
        %s525 = scalar_select %p524, %s24, 1
        %s526 = smul.addr %s525, 8
        %s527 = scalar_lea.vmem %s6, %s526
      $region56: #{rezero_feed_forward.1} parent=51 // pred_fallthru
        _
    $region52: #{rezero_feed_forward.1} parent=5 // pred_fallthru
      _
  $region6: #{rezero_feed_forward.1} parent=0 // loop_footer
    %s17 = sadd.s32 1, %s13
  $region7: #{rezero_feed_forward.1} parent=0 // loop_footer_branch
    %12 = sbr.rel target = $region3
  $region8: #{rezero_feed_forward.1} parent=0 // loop_exit
    _

</llo_original>
